<compile_context>
chip_gen: v5e
topology: v5e:2x2
jax: 0.10.0
libtpu: 0.0.40
codegen_flags: <defaults>
</compile_context>

<pallas_src>
import functools

import jax
import jax.numpy as jnp
from jax.experimental import pallas as pl
from jax.experimental.pallas import tpu as pltpu

_LANES = 128
_MIB = 1024 * 1024
# Conservative per-kernel VMEM budget used for tile sizing: safe on v7x
# (64 MiB physical per TensorCore) as well as v5e/v6e (128 MiB physical).
_VMEM_BUDGET = 40 * _MIB
_VMEM_LIMIT_CAP = 56 * _MIB


def _round_up(x, m):
    return ((x + m - 1) // m) * m


def _sigmoid(x):
    # sigmoid(x) == 0.5 * tanh(0.5 * x) + 0.5 : one EUP push (tanh) instead of
    # the exp/recip pair; matters on v5e, free elsewhere.
    return 0.5 * jnp.tanh(0.5 * x) + 0.5


# ----------------------------------------------------------------------------
# Kernels
# ----------------------------------------------------------------------------
def _dense_kernel(zi_ref, zj_ref, out_ref, acc_ref, *, apply_sigmoid):
    # One (tm, tn) tile of adj = z @ z.T, K-tiled over the feature axis.
    # The "z.T" operand is expressed via dot_general dimension numbers so no
    # transposed copy of z is ever materialized in HBM.
    k = pl.program_id(2)

    @pl.when(k == 0)
    def _():
        acc_ref[...] = jnp.zeros_like(acc_ref)

    acc_ref[...] += jax.lax.dot_general(
        zi_ref[...], zj_ref[...],
        dimension_numbers=(((1,), (1,)), ((), ())),
        preferred_element_type=jnp.float32)

    @pl.when(k == pl.num_programs(2) - 1)
    def _():
        r = acc_ref[...]
        if apply_sigmoid:
            r = _sigmoid(r)
        out_ref[...] = r.astype(out_ref.dtype)


def _edge_kernel(zu_ref, zv_ref, out_ref, *, apply_sigmoid):
    # zu_ref / zv_ref: (r, 128, D) tiles of gathered endpoint embeddings.
    # out_ref:         (r, 128) lane-dense tile of per-edge scores.
    prod = zu_ref[...].astype(jnp.float32) * zv_ref[...].astype(jnp.float32)
    s = jnp.sum(prod, axis=-1)                     # (r, 128), XLU reduce over D
    if apply_sigmoid:
        s = _sigmoid(s)
    out_ref[...] = s.astype(out_ref.dtype)


# ----------------------------------------------------------------------------
# Tiling helpers
# ----------------------------------------------------------------------------
def _dense_tiles(n, d, itemsize):
    # tn stays 512 (lane-dense output stores); tm grows while the
    # double-buffered footprint fits the budget (halves RHS re-streaming and
    # grid-step overhead); tk caps the feature axis so VMEM use is bounded
    # independent of D.
    tk = d if d <= 1024 else 1024
    if n <= 512:
        return n, n, tk
    tn = 512

    def footprint(tm_):
        return (2 * (tm_ + tn) * tk * itemsize     # 2 inputs x 2 buffers
                + 2 * tm_ * tn * 4                 # output x 2 buffers
                + tm_ * tn * 4)                    # f32 accumulator scratch

    tm = 512
    cap = _round_up(n, 128)
    for cand in (2048, 1024, 512):
        if cand <= cap and footprint(cand) <= _VMEM_BUDGET:
            tm = cand
            break
    return tm, tn, tk


def _dense_vmem_limit(tm, tn, tk, itemsize):
    fp = 2 * (tm + tn) * tk * itemsize + 3 * tm * tn * 4
    return int(min(max(fp + 8 * _MIB, 16 * _MIB), _VMEM_LIMIT_CAP))


def _edge_row_tile(g, d, itemsize):
    # One row = 128 edges.  Target ~4 MiB per input block (bigger blocks get
    # closer to the HBM roofline and cost fewer ~0.35us grid steps) while
    # 2 inputs x 2 buffers + the f32 product intermediate + output buffers
    # stay inside the budget.  Output second-minor dim must be a multiple of 8
    # or the full extent.
    if g <= 8:
        return g
    per_row_in = _LANES * d * itemsize
    per_row_f32 = _LANES * d * 4
    r = max(8, min(g, (4 * _MIB) // max(per_row_in, 1)))
    while r > 8 and (4 * r * per_row_in + r * per_row_f32
                     + 4 * r * _LANES * 4) > _VMEM_BUDGET:
        r //= 2
    r = max(8, (r // 8) * 8)
    return min(r, (g // 8) * 8)


def _edge_vmem_limit(r, d, itemsize):
    fp = (4 * r * _LANES * d * itemsize            # 2 inputs x 2 buffers
          + r * _LANES * d * 4                     # f32 product intermediate
          + 4 * r * _LANES * 4)                    # output buffers
    return int(min(max(fp + 8 * _MIB, 16 * _MIB), _VMEM_LIMIT_CAP))


# ----------------------------------------------------------------------------
# Jitted decode paths (cached per shape/dtype/config)
# ----------------------------------------------------------------------------
@functools.partial(jax.jit, static_argnames=("apply_sigmoid", "out_dtype"))
def _dense_decode(z, *, apply_sigmoid, out_dtype):
    n, d = z.shape
    itemsize = jnp.dtype(z.dtype).itemsize
    tm, tn, tk = _dense_tiles(n, d, itemsize)
    if d % tk:
        # Zero-pad the feature axis so every K block is exact (zeros add
        # nothing to the inner product).
        d_pad = _round_up(d, tk)
        z = jnp.pad(z, ((0, 0), (0, d_pad - d)))
        d = d_pad
    grid = (pl.cdiv(n, tm), pl.cdiv(n, tn), d // tk)
    kernel = functools.partial(_dense_kernel, apply_sigmoid=apply_sigmoid)
    return pl.pallas_call(
        kernel,
        out_shape=jax.ShapeDtypeStruct((n, n), jnp.dtype(out_dtype)),
        grid_spec=pltpu.PrefetchScalarGridSpec(
            num_scalar_prefetch=0,
            grid=grid,
            in_specs=[
                pl.BlockSpec((tm, tk), lambda i, j, k: (i, k)),
                pl.BlockSpec((tn, tk), lambda i, j, k: (j, k)),
            ],
            out_specs=pl.BlockSpec((tm, tn), lambda i, j, k: (i, j)),
            scratch_shapes=[pltpu.VMEM((tm, tn), jnp.float32)],
        ),
        compiler_params=pltpu.CompilerParams(
            dimension_semantics=("parallel", "parallel", "arbitrary"),
            vmem_limit_bytes=_dense_vmem_limit(tm, tn, tk, itemsize)),
    )(z, z)


@functools.partial(jax.jit, static_argnames=("apply_sigmoid", "out_dtype"))
def _edge_decode(z, edge_index, *, apply_sigmoid, out_dtype):
    _, d = z.shape
    e = edge_index.shape[1]
    itemsize = jnp.dtype(z.dtype).itemsize

    # Pad the tiny (2, E) int32 index array (NOT the gathered float tensors)
    # so the gather directly emits a lane-dense (e_pad, D) layout.  Index 0 is
    # a valid row; padded results are sliced off at the end.
    e_pad = pl.cdiv(e, _LANES) * _LANES
    if e_pad != e:
        edge_index = jnp.pad(edge_index, ((0, 0), (0, e_pad - e)))

    # TODO(synk): data-dependent row gather stays in XLA (jnp.take); a
    # rectangular BlockSpec cannot express it without per-edge grid steps.
    zu = jnp.take(z, edge_index[0], axis=0)        # (e_pad, D)
    zv = jnp.take(z, edge_index[1], axis=0)        # (e_pad, D)

    g = e_pad // _LANES
    zu3 = zu.reshape(g, _LANES, d)
    zv3 = zv.reshape(g, _LANES, d)

    r = _edge_row_tile(g, d, itemsize)
    kernel = functools.partial(_edge_kernel, apply_sigmoid=apply_sigmoid)
    out = pl.pallas_call(
        kernel,
        out_shape=jax.ShapeDtypeStruct((g, _LANES), jnp.dtype(out_dtype)),
        grid=(pl.cdiv(g, r),),
        in_specs=[
            pl.BlockSpec((r, _LANES, d), lambda i: (i, 0, 0)),
            pl.BlockSpec((r, _LANES, d), lambda i: (i, 0, 0)),
        ],
        out_specs=pl.BlockSpec((r, _LANES), lambda i: (i, 0)),
        compiler_params=pltpu.CompilerParams(
            dimension_semantics=("parallel",),
            vmem_limit_bytes=_edge_vmem_limit(r, d, itemsize)),
    )(zu3, zv3)
    return out.reshape(e_pad)[:e]                  # (E,)


# ----------------------------------------------------------------------------
# Wrapper (mirrors the PyTorch module's forward)
# ----------------------------------------------------------------------------
class InnerProducetDecoder:
    def __init__(self, sigmoid=True, out_dtype=None):
        self.sigmoid_ = bool(sigmoid)
        self.out_dtype_ = out_dtype     # opt-in reduced-precision output

    def __call__(self, z, edge_index=None):
        return self.forward(z, edge_index)

    def forward(self, z, edge_index=None):
        z = jnp.asarray(z)
        if not jnp.issubdtype(z.dtype, jnp.floating):
            z = z.astype(jnp.float32)
        out_dtype = jnp.dtype(self.out_dtype_ or z.dtype).name
        if edge_index is None:
            return _dense_decode(z, apply_sigmoid=self.sigmoid_,
                                 out_dtype=out_dtype)
        edge_index = jnp.asarray(edge_index, dtype=jnp.int32)
        return _edge_decode(z, edge_index, apply_sigmoid=self.sigmoid_,
                            out_dtype=out_dtype)

    def reset_parameters(self):
        return


# ----------------------------------------------------------------------------
# Demo / self-check
# ----------------------------------------------------------------------------
if __name__ == "__main__":
    key = jax.random.PRNGKey(0)
    N, D = 16, 32                      # small node count / embedding dim
    z = jax.random.normal(key, (N, D), dtype=jnp.float32)

    # Deterministic edge list (E = 8 node pairs).
    edge_index = jnp.array(
        [[0, 1, 2, 3, 4, 5, 6, 7],
         [8, 9, 10, 11, 12, 13, 14, 15]], dtype=jnp.int32)

    decoder = InnerProducetDecoder(sigmoid=True)

    # Dense (all-pairs) decode.
    adj_full = jax.block_until_ready(decoder(z))               # (N, N)

    # Edge-index decode.
    adj_edges = jax.block_until_ready(decoder(z, edge_index))  # (E,)

    # Reference checks (plain JAX).
    ref_full = jax.nn.sigmoid(z @ z.T)
    ref_edges = jax.nn.sigmoid(
        jnp.sum(z[edge_index[0]] * z[edge_index[1]], axis=1))

    assert adj_full.shape == (N, N)
    assert adj_edges.shape == (edge_index.shape[1],)
    assert jnp.allclose(adj_full, ref_full, atol=1e-5, rtol=1e-5)
    assert jnp.allclose(adj_edges, ref_edges, atol=1e-5, rtol=1e-5)

    # Also exercise the non-sigmoid paths.
    dec_raw = InnerProducetDecoder(sigmoid=False)
    raw_full = jax.block_until_ready(dec_raw(z))
    raw_edges = jax.block_until_ready(dec_raw(z, edge_index))
    assert jnp.allclose(raw_full, z @ z.T, atol=1e-5, rtol=1e-5)
    assert jnp.allclose(
        raw_edges,
        jnp.sum(z[edge_index[0]] * z[edge_index[1]], axis=1),
        atol=1e-5, rtol=1e-5)

    print("KERNEL_OK")
</pallas_src>

<mosaic_0001>
module attributes {stable_mosaic.version = 11 : i64} {
  func.func @_dense_kernel(%arg0: i32, %arg1: i32, %arg2: i32, %arg3: memref<16x32xf32, #tpu.memory_space<vmem>>, %arg4: memref<16x32xf32, #tpu.memory_space<vmem>>, %arg5: memref<16x16xf32, #tpu.memory_space<vmem>>, %arg6: memref<16x16xf32, #tpu.memory_space<vmem>>) attributes {dimension_semantics = [#tpu.dimension_semantics<parallel>, #tpu.dimension_semantics<parallel>, #tpu.dimension_semantics<arbitrary>], iteration_bounds = array<i64: 1, 1, 1>, scalar_prefetch = 0 : i64, scratch_operands = 1 : i64, tpu.core_type = #tpu.core_type<tc>, window_params = [{transform_indices = @transform_0, window_bounds = array<i64: 16, 32>}, {transform_indices = @transform_1, window_bounds = array<i64: 16, 32>}, {transform_indices = @transform_2, window_bounds = array<i64: 16, 16>}]} {
    %c0_i32 = arith.constant 0 : i32
    %0 = arith.cmpi eq, %arg2, %c0_i32 : i32
    %1 = arith.extui %0 : i1 to i32
    %c0_i32_0 = arith.constant 0 : i32
    %2 = arith.cmpi ne, %1, %c0_i32_0 : i32
    scf.if %2 {
      %cst_10 = arith.constant 0.000000e+00 : f32
      %12 = vector.broadcast %cst_10 : f32 to vector<16x16xf32>
      %c0_11 = arith.constant 0 : index
      %c0_12 = arith.constant 0 : index
      %13 = vector.load %arg6[%c0_11, %c0_12] : memref<16x16xf32, #tpu.memory_space<vmem>>, vector<16x16xf32>
      tpu.vector_store %arg6[%c0_11, %c0_12], %12 {strides = array<i32>} : memref<16x16xf32, #tpu.memory_space<vmem>>, vector<16x16xf32>,
    } else {
    }
    %c0 = arith.constant 0 : index
    %c0_1 = arith.constant 0 : index
    %3 = vector.load %arg6[%c0, %c0_1] : memref<16x16xf32, #tpu.memory_space<vmem>>, vector<16x16xf32>
    %c0_2 = arith.constant 0 : index
    %c0_3 = arith.constant 0 : index
    %4 = vector.load %arg3[%c0_2, %c0_3] : memref<16x32xf32, #tpu.memory_space<vmem>>, vector<16x32xf32>
    %c0_4 = arith.constant 0 : index
    %c0_5 = arith.constant 0 : index
    %5 = vector.load %arg4[%c0_4, %c0_5] : memref<16x32xf32, #tpu.memory_space<vmem>>, vector<16x32xf32>
    %cst = arith.constant dense<0.000000e+00> : vector<16x16xf32>
    %6 = tpu.matmul %4, %5, %cst {dimension_numbers = #tpu.dot_dimension_numbers<[1], [1], [0], [0], [0, 0, 1, 0], [], []>} : vector<16x32xf32>, vector<16x32xf32>, vector<16x16xf32> -> vector<16x16xf32>
    %7 = arith.addf %3, %6 : vector<16x16xf32>
    %c0_6 = arith.constant 0 : index
    %c0_7 = arith.constant 0 : index
    %8 = vector.load %arg6[%c0_6, %c0_7] : memref<16x16xf32, #tpu.memory_space<vmem>>, vector<16x16xf32>
    tpu.vector_store %arg6[%c0_6, %c0_7], %7 {strides = array<i32>} : memref<16x16xf32, #tpu.memory_space<vmem>>, vector<16x16xf32>,
    %c0_i32_8 = arith.constant 0 : i32
    %9 = arith.cmpi eq, %arg2, %c0_i32_8 : i32
    %10 = arith.extui %9 : i1 to i32
    %c0_i32_9 = arith.constant 0 : i32
    %11 = arith.cmpi ne, %10, %c0_i32_9 : i32
    scf.if %11 {
      %c0_10 = arith.constant 0 : index
      %c0_11 = arith.constant 0 : index
      %12 = vector.load %arg6[%c0_10, %c0_11] : memref<16x16xf32, #tpu.memory_space<vmem>>, vector<16x16xf32>
      %cst_12 = arith.constant 5.000000e-01 : f32
      %13 = vector.broadcast %cst_12 : f32 to vector<16x16xf32>
      %14 = arith.mulf %13, %12 : vector<16x16xf32>
      %15 = math.tanh %14 : vector<16x16xf32>
      %cst_13 = arith.constant 5.000000e-01 : f32
      %16 = vector.broadcast %cst_13 : f32 to vector<16x16xf32>
      %17 = arith.mulf %16, %15 : vector<16x16xf32>
      %cst_14 = arith.constant 5.000000e-01 : f32
      %18 = vector.broadcast %cst_14 : f32 to vector<16x16xf32>
      %19 = arith.addf %17, %18 : vector<16x16xf32>
      %c0_15 = arith.constant 0 : index
      %c0_16 = arith.constant 0 : index
      %20 = vector.load %arg5[%c0_15, %c0_16] : memref<16x16xf32, #tpu.memory_space<vmem>>, vector<16x16xf32>
      tpu.vector_store %arg5[%c0_15, %c0_16], %19 {strides = array<i32>} : memref<16x16xf32, #tpu.memory_space<vmem>>, vector<16x16xf32>,
    } else {
    }
    return
  }
  func.func @transform_0(%arg0: i32, %arg1: i32, %arg2: i32) -> (i32, i32) {
    %c0_i32 = arith.constant 0 : i32
    return %arg0, %arg2 : i32, i32
  }
  func.func @transform_1(%arg0: i32, %arg1: i32, %arg2: i32) -> (i32, i32) {
    %c0_i32 = arith.constant 0 : i32
    return %arg1, %arg2 : i32, i32
  }
  func.func @transform_2(%arg0: i32, %arg1: i32, %arg2: i32) -> (i32, i32) {
    %c0_i32 = arith.constant 0 : i32
    return %arg0, %arg1 : i32, i32
  }
}

</mosaic_0001>

<llo_original>
// kernel: _dense_decode.1
$region0: #{_dense_decode.1}
  #allocation0 [shape = 'u32[]', space=smem, size = 0x4, offset = 0x4, fixed_abs, tag = 'smem constant byte address 0x4 - core index']
  #allocation1 [shape = 'u32[72,128]{1,0:T(1,128)}', space=vmem, size = 0x9000, scoped, tag = 'internal scratch']
  #allocation2 [shape = 'f32[16,16]{1,0:T(8,128)}', space=vmem, size = 0x2000, scoped, tag = 'scratch operand']
  %s0 = inlined_call_operand.hbm [shape: f32[16,32], index: 0, kind: input, shape index: {}, may-alias: {0,1}]
  %s1 = inlined_call_operand.hbm [shape: f32[16,32], index: 1, kind: input, shape index: {}, may-alias: {0,1}]
  %s2 = inlined_call_operand.hbm [shape: f32[16,16], index: 2, kind: output, shape index: {}]
  %s3 = sld [smem:[#allocation0]]
  $region34: #{_dense_decode.1} parent=0
    _
  %s5 = ssub.s32 1, %s3
  %s6 = scalar_select 0, %s5, %s3
  $region1: #{_dense_decode.1} parent=0
    #allocation3 [shape = 'u8[8192]{0}', space=vmem, size = 0x2000, scoped, tag = 'input window, operand 0, single buffered']
    #allocation4 [shape = 's32[1]{0}', space=sflag, size = 0x4, scoped, tag = 'scoped memory for _dense_decode.1']
    #allocation5 [shape = 's32[1]{0}', space=sflag, size = 0x4, scoped, tag = 'scoped memory for _dense_decode.1']
    #allocation6 [shape = 'u8[8192]{0}', space=vmem, size = 0x2000, scoped, tag = 'input window, operand 1, single buffered']
    #allocation7 [shape = 's32[1]{0}', space=sflag, size = 0x4, scoped, tag = 'scoped memory for _dense_decode.1']
    #allocation8 [shape = 'u8[8192]{0}', space=vmem, size = 0x2000, scoped, tag = 'output window, operand 0, single buffered']
    %7 = vsyncpa [#allocation4], 0
    %8 = vsyncpa [#allocation7], 0
    %9 = vsyncpa [#allocation5], 0
    // Predicated region
    $region2: #{_dense_decode.1} parent=1 // pred_check
      _
    $region3: #{_dense_decode.1} parent=1 // pred_check_branch
      %11 = sbr.rel (0) target = $region5
    $region4: #{_dense_decode.1} parent=1 // pred_region
      %13 = vsyncadd [#allocation4], 0
      %s14 = sshll.u32 %s0, 4
      %s15 = int_to_ptr.hbm [resolvable:$true] %s14
      %s16 = sshll.u32 [#allocation3], 4
      %s17 = int_to_ptr.vmem [resolvable:$true] %s16
      %22 = dma.hbm_to_vmem [thread:$0]  %s15, 256, %s17, [#allocation4], 128, 128, 8
    $region5: #{_dense_decode.1} parent=1 // pred_fallthru
      _
    // Predicated region
    $region6: #{_dense_decode.1} parent=1 // pred_check
      _
    $region7: #{_dense_decode.1} parent=1 // pred_check_branch
      %24 = sbr.rel (0) target = $region9
    $region8: #{_dense_decode.1} parent=1 // pred_region
      %26 = vsyncadd [#allocation7], 0
      %s27 = sshll.u32 %s1, 4
      %s28 = int_to_ptr.hbm [resolvable:$true] %s27
      %s29 = sshll.u32 [#allocation6], 4
      %s30 = int_to_ptr.vmem [resolvable:$true] %s29
      %35 = dma.hbm_to_vmem [thread:$0]  %s28, 256, %s30, [#allocation7], 128, 128, 8
    $region9: #{_dense_decode.1} parent=1 // pred_fallthru
      _
    // Predicated region
    $region10: #{_dense_decode.1} parent=1 // pred_check
      _
    $region11: #{_dense_decode.1} parent=1 // pred_check_branch
      %37 = sbr.rel (0) target = $region13
    $region12: #{_dense_decode.1} parent=1 // pred_region
      %39 = dma.done [#allocation4], 256
    $region13: #{_dense_decode.1} parent=1 // pred_fallthru
      _
    // Predicated region
    $region14: #{_dense_decode.1} parent=1 // pred_check
      _
    $region15: #{_dense_decode.1} parent=1 // pred_check_branch
      %41 = sbr.rel (0) target = $region17
    $region16: #{_dense_decode.1} parent=1 // pred_region
      %43 = dma.done [#allocation7], 256
    $region17: #{_dense_decode.1} parent=1 // pred_fallthru
      _
    %p44 = scmp.eq.s32.totalorder 0, 0
    // Predicated region
    $region18: #{_dense_decode.1} parent=1 // pred_check
      %p45 = pneg %p44
    $region19: #{_dense_decode.1} parent=1 // pred_check_branch
      %47 = sbr.rel (%p45) target = $region21
    $region20: #{_dense_decode.1} parent=1 // pred_region
      %vm48 = vcmask 130048
      %49 = vst.msk [vmem:[#allocation2] sm:$0xff] %vm48, 0.0
      %50 = vst.msk [vmem:[#allocation2 + $0x8] sm:$0xff] %vm48, 0.0
    $region21: #{_dense_decode.1} parent=1 // pred_fallthru
      _
    %v51 = vld [vmem:[#allocation2] sm:$0xff]
    %v52 = vld [vmem:[#allocation2 + $0x8] sm:$0xff]
    %v53 = vld [vmem:[#allocation3] sm:$0xff]
    %v54 = vld [vmem:[#allocation3 + $0x8] sm:$0xff]
    %v55 = vld [vmem:[#allocation6] sm:$0xff]
    %v56 = vld [vmem:[#allocation6 + $0x8] sm:$0xff]
    %vm57 = vcmask 261120
    %v59 = vsel %vm57, %v53, 0
    %v62 = vsel %vm57, %v54, 0
    %v65 = vsel %vm57, %v55, 0
    %v68 = vsel %vm57, %v56, 0
    %70 = vmatpush.xpose.msra.mxu0 0.0
    %71 = vmatpush.xpose.msra.mxu0 0.0
    %72 = vmatpush.xpose.msra.mxu0 0.0
    %73 = vmatpush.xpose.msra.mxu0 0.0
    %74 = vmatpush.xpose.msra.mxu0 0.0
    %75 = vmatpush.xpose.msra.mxu0 0.0
    %76 = vmatpush.xpose.msra.mxu0 0.0
    %77 = vmatpush.xpose.msra.mxu0 0.0
    %78 = vmatpush.xpose.msra.mxu0 0.0
    %79 = vmatpush.xpose.msra.mxu0 0.0
    %80 = vmatpush.xpose.msra.mxu0 0.0
    %81 = vmatpush.xpose.msra.mxu0 0.0
    %82 = vmatpush.xpose.msra.mxu0 0.0
    %83 = vmatpush.xpose.msra.mxu0 0.0
    %84 = vmatpush.xpose.msra.mxu0 %v68
    %85 = vmatpush.xpose.msra.mxu0 %v65
    %86 = vmatmul.f32.gmra.mxu0 %v59
    %v87 = vpop.f32.mrf.mxu0
    %v88 = vadd.f32 0.0, %v87
    %89 = vmatmul.f32.gmra.mxu0 %v62
    %v90 = vpop.f32.mrf.mxu0
    %v91 = vadd.f32 0.0, %v90
    %92 = vdwg.mxu0
    %v93 = vadd.f32 %v51, %v88
    %v94 = vadd.f32 %v52, %v91
    %vm95 = vcmask 130048
    %96 = vst.msk [vmem:[#allocation2] sm:$0xff] %vm95, %v93
    %97 = vst.msk [vmem:[#allocation2 + $0x8] sm:$0xff] %vm95, %v94
    // Predicated region
    $region22: #{_dense_decode.1} parent=1 // pred_check
      %p98 = pneg %p44
    $region23: #{_dense_decode.1} parent=1 // pred_check_branch
      %100 = sbr.rel (%p98) target = $region25
    $region24: #{_dense_decode.1} parent=1 // pred_region
      %v101 = vld [vmem:[#allocation2] sm:$0xff]
      %v102 = vld [vmem:[#allocation2 + $0x8] sm:$0xff]
      %v103 = vmul.f32 %v101, 0.5
      %v104 = vmul.f32 %v102, 0.5
      %v105 = vtanh.pop %v103
      %v106 = vtanh.pop %v104
      %v107 = vmul.f32 %v105, 0.5
      %v108 = vmul.f32 %v106, 0.5
      %v109 = vadd.f32 %v107, 0.5
      %v110 = vadd.f32 %v108, 0.5
      %111 = vst.msk [vmem:[#allocation8] sm:$0xff] %vm95, %v109
      %112 = vst.msk [vmem:[#allocation8 + $0x8] sm:$0xff] %vm95, %v110
    $region25: #{_dense_decode.1} parent=1 // pred_fallthru
      _
    // Predicated region
    $region26: #{_dense_decode.1} parent=1 // pred_check
      _
    $region27: #{_dense_decode.1} parent=1 // pred_check_branch
      %114 = sbr.rel (0) target = $region29
    $region28: #{_dense_decode.1} parent=1 // pred_region
      %116 = vsyncadd [#allocation5], 0
      %s117 = sshll.u32 [#allocation8], 4
      %s118 = int_to_ptr.vmem [resolvable:$true] %s117
      %s119 = sshll.u32 %s2, 4
      %s120 = int_to_ptr.hbm [resolvable:$true] %s119
      %125 = dma.vmem_to_hbm [thread:$0]  %s118, 256, %s120, [#allocation5], 128, 128, 8
    $region29: #{_dense_decode.1} parent=1 // pred_fallthru
      _
    // Predicated region
    $region30: #{_dense_decode.1} parent=1 // pred_check
      _
    $region31: #{_dense_decode.1} parent=1 // pred_check_branch
      %127 = sbr.rel (0) target = $region33
    $region32: #{_dense_decode.1} parent=1 // pred_region
      %129 = dma.done [#allocation5], 256
    $region33: #{_dense_decode.1} parent=1 // pred_fallthru
      _
    %130 = vsyncpa [#allocation4], 1
    %131 = vsyncpa [#allocation7], 1
    %132 = vsyncpa [#allocation5], 1

</llo_original>
